<compile_context>
chip_gen: v6e
topology: v6e:2x2x1
jax: 0.10.0
libtpu: 0.0.40
codegen_flags: <defaults>
</compile_context>

<pallas_src>
import jax
import jax.numpy as jnp
from jax.experimental import pallas as pl
from jax.experimental.pallas import tpu as pltpu

LANE = 128     # TPU lane width
MAX_TB = 256   # max batch tile (raise MXU row utilization on big batches)


def _round_up(x, m):
    return ((x + m - 1) // m) * m


def mlp_kernel(ids_ref,                               # VMEM [TB, S] int32 token ids
               emb_ref,                               # VMEM [V_p, D_p] bf16 (resident)
               w1_ref, b1_ref, w2_ref, b2_ref,
               w3_ref, b3_ref, w4_ref, b4_ref,        # VMEM weights bf16 / biases f32
               out_ref):                              # VMEM [TB, O_p] f32
    tb, seq = ids_ref.shape
    v_p = emb_ref.shape[0]

    # --- fused embedding gather + mean as a one-hot matmul on the MXU ---
    ids = ids_ref[...]                                           # [TB, S] int32
    vocab_iota = jax.lax.broadcasted_iota(jnp.int32, (tb, v_p), 1)
    counts = jnp.zeros((tb, v_p), jnp.float32)
    for s in range(seq):                                         # S static -> unrolled
        counts += (vocab_iota == ids[:, s:s + 1]).astype(jnp.float32)
    # counts/S is exact in bf16 (small int / power of two) -> pooling == bf16 mean.
    weights = (counts * (1.0 / seq)).astype(jnp.bfloat16)        # [TB, V_p]
    pooled = jnp.dot(weights, emb_ref[...],
                     preferred_element_type=jnp.float32)         # [TB, D_p] f32

    # --- 4-layer MLP: bf16 operands on the MXU, f32 accumulation, f32 bias/ReLU ---
    h = jnp.dot(pooled.astype(jnp.bfloat16), w1_ref[...],
                preferred_element_type=jnp.float32) + b1_ref[...]
    h = jnp.maximum(h, 0.0)
    # dropout (eval mode) == identity
    h = jnp.dot(h.astype(jnp.bfloat16), w2_ref[...],
                preferred_element_type=jnp.float32) + b2_ref[...]
    h = jnp.maximum(h, 0.0)
    h = jnp.dot(h.astype(jnp.bfloat16), w3_ref[...],
                preferred_element_type=jnp.float32) + b3_ref[...]
    h = jnp.maximum(h, 0.0)
    out = jnp.dot(h.astype(jnp.bfloat16), w4_ref[...],
                  preferred_element_type=jnp.float32) + b4_ref[...]
    out_ref[...] = out.astype(out_ref.dtype)


def mlp_forward(x_ids, params):
    """x_ids: [B, S] int32 token indices; returns [B, output_dim] f32 logits."""
    emb = params["embedding"]                         # [V, D] f32 (pretrained, frozen)
    w1, b1 = params["w1"], params["b1"]
    w2, b2 = params["w2"], params["b2"]
    w3, b3 = params["w3"], params["b3"]
    w4, b4 = params["w4"], params["b4"]

    V, D = emb.shape
    H, Hh, O = w1.shape[1], w3.shape[1], w4.shape[1]
    B, S = x_ids.shape

    V_p, D_p, H_p, Hh_p, O_p = (_round_up(d, LANE) for d in (V, D, H, Hh, O))
    TB = min(MAX_TB, _round_up(B, 8))
    B_p = _round_up(B, TB)

    def pad2(a, r, c, dtype):
        return jnp.pad(a, ((0, r - a.shape[0]), (0, c - a.shape[1]))).astype(dtype)

    emb_p = pad2(emb, V_p, D_p, jnp.bfloat16)         # VMEM-resident, bf16 (review item)
    w1_p, b1_p = pad2(w1, D_p, H_p, jnp.bfloat16), pad2(b1, 1, H_p, jnp.float32)
    w2_p, b2_p = pad2(w2, H_p, H_p, jnp.bfloat16), pad2(b2, 1, H_p, jnp.float32)
    w3_p, b3_p = pad2(w3, H_p, Hh_p, jnp.bfloat16), pad2(b3, 1, Hh_p, jnp.float32)
    w4_p, b4_p = pad2(w4, Hh_p, O_p, jnp.bfloat16), pad2(b4, 1, O_p, jnp.float32)
    ids_p = jnp.pad(x_ids, ((0, B_p - B), (0, 0))).astype(jnp.int32)

    wbytes = 2 * (V_p * D_p + D_p * H_p + H_p * H_p + H_p * Hh_p + Hh_p * O_p)
    flops = 2 * B_p * (V_p * D_p + D_p * H_p + H_p * H_p + H_p * Hh_p + Hh_p * O_p)
    bytes_accessed = (ids_p.size * 4                      # token ids
                      + wbytes                            # bf16 emb table + weights
                      + 4 * (2 * H_p + Hh_p + O_p)        # f32 biases
                      + B_p * O_p * 4)                    # output

    def const_spec(shape):                                # resident across batch tiles
        return pl.BlockSpec(shape, lambda i: (0, 0))

    out = pl.pallas_call(
        mlp_kernel,
        out_shape=jax.ShapeDtypeStruct((B_p, O_p), jnp.float32),
        grid_spec=pltpu.PrefetchScalarGridSpec(
            num_scalar_prefetch=0,
            grid=(B_p // TB,),
            in_specs=[
                pl.BlockSpec((TB, S), lambda i: (i, 0)),   # token ids per batch tile
                const_spec((V_p, D_p)),                    # embedding table (bf16)
                const_spec((D_p, H_p)), const_spec((1, H_p)),
                const_spec((H_p, H_p)), const_spec((1, H_p)),
                const_spec((H_p, Hh_p)), const_spec((1, Hh_p)),
                const_spec((Hh_p, O_p)), const_spec((1, O_p)),
            ],
            out_specs=pl.BlockSpec((TB, O_p), lambda i: (i, 0)),
        ),
        compiler_params=pltpu.CompilerParams(
            dimension_semantics=("parallel",),             # pays off on v7x's 2 TCs
            vmem_limit_bytes=32 * 1024 * 1024),
        cost_estimate=pl.CostEstimate(flops=flops, transcendentals=0,
                                      bytes_accessed=bytes_accessed),
    )(ids_p, emb_p, w1_p, b1_p, w2_p, b2_p, w3_p, b3_p, w4_p, b4_p)

    return out[:B, :O]


def init_params(key, vocab_size, embedding_dim, hidden_dim, output_dim):
    """Deterministic synthetic parameters matching the PyTorch module shapes.

    PyTorch nn.Linear stores weight as [out, in]; we keep the math-equivalent
    [in, out] layout so the kernel computes x @ W + b.
    """
    ks = jax.random.split(key, 5)
    half = hidden_dim // 2

    def lin(k, fan_in, fan_out):
        bound = 1.0 / jnp.sqrt(jnp.float32(fan_in))
        kw, kb = jax.random.split(k)
        w = jax.random.uniform(kw, (fan_in, fan_out), jnp.float32, -bound, bound)
        b = jax.random.uniform(kb, (1, fan_out), jnp.float32, -bound, bound)
        return w, b

    embedding = jax.random.normal(ks[0], (vocab_size, embedding_dim), jnp.float32)
    w1, b1 = lin(ks[1], embedding_dim, hidden_dim)
    w2, b2 = lin(ks[2], hidden_dim, hidden_dim)
    w3, b3 = lin(ks[3], hidden_dim, half)
    w4, b4 = lin(ks[4], half, output_dim)

    return {"embedding": embedding,
            "w1": w1, "b1": b1,
            "w2": w2, "b2": b2,
            "w3": w3, "b3": b3,
            "w4": w4, "b4": b4}


if __name__ == "__main__":
    # Small shapes consistent with the module's forward:
    # x: [batch, seq] token ids; embedding_dim=32, hidden_dim=32, output_dim=2.
    batch, seq = 4, 8
    vocab_size, embedding_dim, hidden_dim, output_dim = 64, 32, 32, 2

    key = jax.random.PRNGKey(0)
    k_param, k_ids = jax.random.split(key)
    params = init_params(k_param, vocab_size, embedding_dim, hidden_dim, output_dim)
    x_ids = jax.random.randint(k_ids, (batch, seq), 0, vocab_size, dtype=jnp.int32)

    fwd = jax.jit(mlp_forward)
    out = jax.block_until_ready(fwd(x_ids, params))

    # Pure-JAX reference mirroring the kernel's bf16-embedding / bf16-weight math.
    def ref_forward(x_ids, params):
        emb_bf = params["embedding"].astype(jnp.bfloat16).astype(jnp.float32)
        h = jnp.mean(jnp.take(emb_bf, x_ids, axis=0), axis=1)    # [B, D] f32
        for wk, bk in (("w1", "b1"), ("w2", "b2"), ("w3", "b3"), ("w4", "b4")):
            w = params[wk].astype(jnp.bfloat16)
            h = jnp.dot(h.astype(jnp.bfloat16), w,
                        preferred_element_type=jnp.float32) + params[bk]
            if wk != "w4":
                h = jnp.maximum(h, 0.0)
        return h

    ref = ref_forward(x_ids, params)
    assert out.shape == (batch, output_dim)
    assert jnp.allclose(out, ref, atol=1e-3, rtol=1e-2), (out, ref)

    print("KERNEL_OK")
</pallas_src>

<mosaic_0001>
module attributes {stable_mosaic.version = 11 : i64} {
  func.func @mlp_kernel(%arg0: i32, %arg1: memref<8x8xi32, #tpu.memory_space<vmem>>, %arg2: memref<128x128xbf16, #tpu.memory_space<vmem>>, %arg3: memref<128x128xbf16, #tpu.memory_space<vmem>>, %arg4: memref<1x128xf32, #tpu.memory_space<vmem>>, %arg5: memref<128x128xbf16, #tpu.memory_space<vmem>>, %arg6: memref<1x128xf32, #tpu.memory_space<vmem>>, %arg7: memref<128x128xbf16, #tpu.memory_space<vmem>>, %arg8: memref<1x128xf32, #tpu.memory_space<vmem>>, %arg9: memref<128x128xbf16, #tpu.memory_space<vmem>>, %arg10: memref<1x128xf32, #tpu.memory_space<vmem>>, %arg11: memref<8x128xf32, #tpu.memory_space<vmem>>) attributes {dimension_semantics = [#tpu.dimension_semantics<parallel>], iteration_bounds = array<i64: 1>, scalar_prefetch = 0 : i64, scratch_operands = 0 : i64, tpu.core_type = #tpu.core_type<tc>, window_params = [{transform_indices = @transform_0, window_bounds = array<i64: 8, 8>}, {pipeline_mode = #tpu.pipeline_mode<synchronous>, transform_indices = @transform_1, window_bounds = array<i64: 128, 128>}, {pipeline_mode = #tpu.pipeline_mode<synchronous>, transform_indices = @transform_2, window_bounds = array<i64: 128, 128>}, {pipeline_mode = #tpu.pipeline_mode<synchronous>, transform_indices = @transform_3, window_bounds = array<i64: 1, 128>}, {pipeline_mode = #tpu.pipeline_mode<synchronous>, transform_indices = @transform_4, window_bounds = array<i64: 128, 128>}, {pipeline_mode = #tpu.pipeline_mode<synchronous>, transform_indices = @transform_5, window_bounds = array<i64: 1, 128>}, {pipeline_mode = #tpu.pipeline_mode<synchronous>, transform_indices = @transform_6, window_bounds = array<i64: 128, 128>}, {pipeline_mode = #tpu.pipeline_mode<synchronous>, transform_indices = @transform_7, window_bounds = array<i64: 1, 128>}, {pipeline_mode = #tpu.pipeline_mode<synchronous>, transform_indices = @transform_8, window_bounds = array<i64: 128, 128>}, {pipeline_mode = #tpu.pipeline_mode<synchronous>, transform_indices = @transform_9, window_bounds = array<i64: 1, 128>}, {transform_indices = @transform_10, window_bounds = array<i64: 8, 128>}]} {
    %c0 = arith.constant 0 : index
    %c0_0 = arith.constant 0 : index
    %0 = vector.load %arg1[%c0, %c0_0] : memref<8x8xi32, #tpu.memory_space<vmem>>, vector<8x8xi32>
    %1 = tpu.iota {dimensions = array<i32: 1>} : vector<8x128xi32>
    %cst = arith.constant 0.000000e+00 : f32
    %2 = vector.broadcast %cst : f32 to vector<8x128xf32>
    %3 = vector.extract_strided_slice %0 {offsets = [0, 0], sizes = [8, 1], strides = [1, 1]} : vector<8x8xi32> to vector<8x1xi32>
    %4 = vector.broadcast %3 : vector<8x1xi32> to vector<8x128xi32>
    %5 = arith.cmpi eq, %1, %4 : vector<8x128xi32>
    %6 = arith.extui %5 : vector<8x128xi1> to vector<8x128xi32>
    %7 = arith.sitofp %6 : vector<8x128xi32> to vector<8x128xf32>
    %8 = arith.addf %2, %7 : vector<8x128xf32>
    %9 = vector.extract_strided_slice %0 {offsets = [0, 1], sizes = [8, 1], strides = [1, 1]} : vector<8x8xi32> to vector<8x1xi32>
    %10 = vector.broadcast %9 : vector<8x1xi32> to vector<8x128xi32>
    %11 = arith.cmpi eq, %1, %10 : vector<8x128xi32>
    %12 = arith.extui %11 : vector<8x128xi1> to vector<8x128xi32>
    %13 = arith.sitofp %12 : vector<8x128xi32> to vector<8x128xf32>
    %14 = arith.addf %8, %13 : vector<8x128xf32>
    %15 = vector.extract_strided_slice %0 {offsets = [0, 2], sizes = [8, 1], strides = [1, 1]} : vector<8x8xi32> to vector<8x1xi32>
    %16 = vector.broadcast %15 : vector<8x1xi32> to vector<8x128xi32>
    %17 = arith.cmpi eq, %1, %16 : vector<8x128xi32>
    %18 = arith.extui %17 : vector<8x128xi1> to vector<8x128xi32>
    %19 = arith.sitofp %18 : vector<8x128xi32> to vector<8x128xf32>
    %20 = arith.addf %14, %19 : vector<8x128xf32>
    %21 = vector.extract_strided_slice %0 {offsets = [0, 3], sizes = [8, 1], strides = [1, 1]} : vector<8x8xi32> to vector<8x1xi32>
    %22 = vector.broadcast %21 : vector<8x1xi32> to vector<8x128xi32>
    %23 = arith.cmpi eq, %1, %22 : vector<8x128xi32>
    %24 = arith.extui %23 : vector<8x128xi1> to vector<8x128xi32>
    %25 = arith.sitofp %24 : vector<8x128xi32> to vector<8x128xf32>
    %26 = arith.addf %20, %25 : vector<8x128xf32>
    %27 = vector.extract_strided_slice %0 {offsets = [0, 4], sizes = [8, 1], strides = [1, 1]} : vector<8x8xi32> to vector<8x1xi32>
    %28 = vector.broadcast %27 : vector<8x1xi32> to vector<8x128xi32>
    %29 = arith.cmpi eq, %1, %28 : vector<8x128xi32>
    %30 = arith.extui %29 : vector<8x128xi1> to vector<8x128xi32>
    %31 = arith.sitofp %30 : vector<8x128xi32> to vector<8x128xf32>
    %32 = arith.addf %26, %31 : vector<8x128xf32>
    %33 = vector.extract_strided_slice %0 {offsets = [0, 5], sizes = [8, 1], strides = [1, 1]} : vector<8x8xi32> to vector<8x1xi32>
    %34 = vector.broadcast %33 : vector<8x1xi32> to vector<8x128xi32>
    %35 = arith.cmpi eq, %1, %34 : vector<8x128xi32>
    %36 = arith.extui %35 : vector<8x128xi1> to vector<8x128xi32>
    %37 = arith.sitofp %36 : vector<8x128xi32> to vector<8x128xf32>
    %38 = arith.addf %32, %37 : vector<8x128xf32>
    %39 = vector.extract_strided_slice %0 {offsets = [0, 6], sizes = [8, 1], strides = [1, 1]} : vector<8x8xi32> to vector<8x1xi32>
    %40 = vector.broadcast %39 : vector<8x1xi32> to vector<8x128xi32>
    %41 = arith.cmpi eq, %1, %40 : vector<8x128xi32>
    %42 = arith.extui %41 : vector<8x128xi1> to vector<8x128xi32>
    %43 = arith.sitofp %42 : vector<8x128xi32> to vector<8x128xf32>
    %44 = arith.addf %38, %43 : vector<8x128xf32>
    %45 = vector.extract_strided_slice %0 {offsets = [0, 7], sizes = [8, 1], strides = [1, 1]} : vector<8x8xi32> to vector<8x1xi32>
    %46 = vector.broadcast %45 : vector<8x1xi32> to vector<8x128xi32>
    %47 = arith.cmpi eq, %1, %46 : vector<8x128xi32>
    %48 = arith.extui %47 : vector<8x128xi1> to vector<8x128xi32>
    %49 = arith.sitofp %48 : vector<8x128xi32> to vector<8x128xf32>
    %50 = arith.addf %44, %49 : vector<8x128xf32>
    %cst_1 = arith.constant 1.250000e-01 : f32
    %51 = vector.broadcast %cst_1 : f32 to vector<8x128xf32>
    %52 = arith.mulf %50, %51 : vector<8x128xf32>
    %53 = arith.truncf %52 : vector<8x128xf32> to vector<8x128xbf16>
    %c0_2 = arith.constant 0 : index
    %c0_3 = arith.constant 0 : index
    %54 = vector.load %arg2[%c0_2, %c0_3] : memref<128x128xbf16, #tpu.memory_space<vmem>>, vector<128x128xbf16>
    %cst_4 = arith.constant dense<0.000000e+00> : vector<8x128xf32>
    %55 = tpu.matmul %53, %54, %cst_4 {dimension_numbers = #tpu.dot_dimension_numbers<[1], [0], [0], [1], [0, 0, 1, 1], [], []>} : vector<8x128xbf16>, vector<128x128xbf16>, vector<8x128xf32> -> vector<8x128xf32>
    %56 = arith.truncf %55 : vector<8x128xf32> to vector<8x128xbf16>
    %c0_5 = arith.constant 0 : index
    %c0_6 = arith.constant 0 : index
    %57 = vector.load %arg3[%c0_5, %c0_6] : memref<128x128xbf16, #tpu.memory_space<vmem>>, vector<128x128xbf16>
    %cst_7 = arith.constant dense<0.000000e+00> : vector<8x128xf32>
    %58 = tpu.matmul %56, %57, %cst_7 {dimension_numbers = #tpu.dot_dimension_numbers<[1], [0], [0], [1], [0, 0, 1, 1], [], []>} : vector<8x128xbf16>, vector<128x128xbf16>, vector<8x128xf32> -> vector<8x128xf32>
    %c0_8 = arith.constant 0 : index
    %c0_9 = arith.constant 0 : index
    %59 = vector.load %arg4[%c0_8, %c0_9] : memref<1x128xf32, #tpu.memory_space<vmem>>, vector<1x128xf32>
    %60 = vector.broadcast %59 : vector<1x128xf32> to vector<8x128xf32>
    %61 = arith.addf %58, %60 : vector<8x128xf32>
    %cst_10 = arith.constant 0.000000e+00 : f32
    %62 = vector.broadcast %cst_10 : f32 to vector<8x128xf32>
    %63 = arith.maximumf %61, %62 : vector<8x128xf32>
    %64 = arith.truncf %63 : vector<8x128xf32> to vector<8x128xbf16>
    %c0_11 = arith.constant 0 : index
    %c0_12 = arith.constant 0 : index
    %65 = vector.load %arg5[%c0_11, %c0_12] : memref<128x128xbf16, #tpu.memory_space<vmem>>, vector<128x128xbf16>
    %cst_13 = arith.constant dense<0.000000e+00> : vector<8x128xf32>
    %66 = tpu.matmul %64, %65, %cst_13 {dimension_numbers = #tpu.dot_dimension_numbers<[1], [0], [0], [1], [0, 0, 1, 1], [], []>} : vector<8x128xbf16>, vector<128x128xbf16>, vector<8x128xf32> -> vector<8x128xf32>
    %c0_14 = arith.constant 0 : index
    %c0_15 = arith.constant 0 : index
    %67 = vector.load %arg6[%c0_14, %c0_15] : memref<1x128xf32, #tpu.memory_space<vmem>>, vector<1x128xf32>
    %68 = vector.broadcast %67 : vector<1x128xf32> to vector<8x128xf32>
    %69 = arith.addf %66, %68 : vector<8x128xf32>
    %cst_16 = arith.constant 0.000000e+00 : f32
    %70 = vector.broadcast %cst_16 : f32 to vector<8x128xf32>
    %71 = arith.maximumf %69, %70 : vector<8x128xf32>
    %72 = arith.truncf %71 : vector<8x128xf32> to vector<8x128xbf16>
    %c0_17 = arith.constant 0 : index
    %c0_18 = arith.constant 0 : index
    %73 = vector.load %arg7[%c0_17, %c0_18] : memref<128x128xbf16, #tpu.memory_space<vmem>>, vector<128x128xbf16>
    %cst_19 = arith.constant dense<0.000000e+00> : vector<8x128xf32>
    %74 = tpu.matmul %72, %73, %cst_19 {dimension_numbers = #tpu.dot_dimension_numbers<[1], [0], [0], [1], [0, 0, 1, 1], [], []>} : vector<8x128xbf16>, vector<128x128xbf16>, vector<8x128xf32> -> vector<8x128xf32>
    %c0_20 = arith.constant 0 : index
    %c0_21 = arith.constant 0 : index
    %75 = vector.load %arg8[%c0_20, %c0_21] : memref<1x128xf32, #tpu.memory_space<vmem>>, vector<1x128xf32>
    %76 = vector.broadcast %75 : vector<1x128xf32> to vector<8x128xf32>
    %77 = arith.addf %74, %76 : vector<8x128xf32>
    %cst_22 = arith.constant 0.000000e+00 : f32
    %78 = vector.broadcast %cst_22 : f32 to vector<8x128xf32>
    %79 = arith.maximumf %77, %78 : vector<8x128xf32>
    %80 = arith.truncf %79 : vector<8x128xf32> to vector<8x128xbf16>
    %c0_23 = arith.constant 0 : index
    %c0_24 = arith.constant 0 : index
    %81 = vector.load %arg9[%c0_23, %c0_24] : memref<128x128xbf16, #tpu.memory_space<vmem>>, vector<128x128xbf16>
    %cst_25 = arith.constant dense<0.000000e+00> : vector<8x128xf32>
    %82 = tpu.matmul %80, %81, %cst_25 {dimension_numbers = #tpu.dot_dimension_numbers<[1], [0], [0], [1], [0, 0, 1, 1], [], []>} : vector<8x128xbf16>, vector<128x128xbf16>, vector<8x128xf32> -> vector<8x128xf32>
    %c0_26 = arith.constant 0 : index
    %c0_27 = arith.constant 0 : index
    %83 = vector.load %arg10[%c0_26, %c0_27] : memref<1x128xf32, #tpu.memory_space<vmem>>, vector<1x128xf32>
    %84 = vector.broadcast %83 : vector<1x128xf32> to vector<8x128xf32>
    %85 = arith.addf %82, %84 : vector<8x128xf32>
    %c0_28 = arith.constant 0 : index
    %c0_29 = arith.constant 0 : index
    %86 = vector.load %arg11[%c0_28, %c0_29] : memref<8x128xf32, #tpu.memory_space<vmem>>, vector<8x128xf32>
    tpu.vector_store %arg11[%c0_28, %c0_29], %85 {strides = array<i32>} : memref<8x128xf32, #tpu.memory_space<vmem>>, vector<8x128xf32>,
    return
  }
  func.func @transform_0(%arg0: i32) -> (i32, i32) {
    %c0_i32 = arith.constant 0 : i32
    %c0_i32_0 = arith.constant 0 : i32
    return %arg0, %c0_i32 : i32, i32
  }
  func.func @transform_1(%arg0: i32) -> (i32, i32) {
    %c0_i32 = arith.constant 0 : i32
    %c0_i32_0 = arith.constant 0 : i32
    %c0_i32_1 = arith.constant 0 : i32
    return %c0_i32, %c0_i32_0 : i32, i32
  }
  func.func @transform_2(%arg0: i32) -> (i32, i32) {
    %c0_i32 = arith.constant 0 : i32
    %c0_i32_0 = arith.constant 0 : i32
    %c0_i32_1 = arith.constant 0 : i32
    return %c0_i32, %c0_i32_0 : i32, i32
  }
  func.func @transform_3(%arg0: i32) -> (i32, i32) {
    %c0_i32 = arith.constant 0 : i32
    %c0_i32_0 = arith.constant 0 : i32
    %c0_i32_1 = arith.constant 0 : i32
    return %c0_i32, %c0_i32_0 : i32, i32
  }
  func.func @transform_4(%arg0: i32) -> (i32, i32) {
    %c0_i32 = arith.constant 0 : i32
    %c0_i32_0 = arith.constant 0 : i32
    %c0_i32_1 = arith.constant 0 : i32
    return %c0_i32, %c0_i32_0 : i32, i32
  }
  func.func @transform_5(%arg0: i32) -> (i32, i32) {
    %c0_i32 = arith.constant 0 : i32
    %c0_i32_0 = arith.constant 0 : i32
    %c0_i32_1 = arith.constant 0 : i32
    return %c0_i32, %c0_i32_0 : i32, i32
  }
  func.func @transform_6(%arg0: i32) -> (i32, i32) {
    %c0_i32 = arith.constant 0 : i32
    %c0_i32_0 = arith.constant 0 : i32
    %c0_i32_1 = arith.constant 0 : i32
    return %c0_i32, %c0_i32_0 : i32, i32
  }
  func.func @transform_7(%arg0: i32) -> (i32, i32) {
    %c0_i32 = arith.constant 0 : i32
    %c0_i32_0 = arith.constant 0 : i32
    %c0_i32_1 = arith.constant 0 : i32
    return %c0_i32, %c0_i32_0 : i32, i32
  }
  func.func @transform_8(%arg0: i32) -> (i32, i32) {
    %c0_i32 = arith.constant 0 : i32
    %c0_i32_0 = arith.constant 0 : i32
    %c0_i32_1 = arith.constant 0 : i32
    return %c0_i32, %c0_i32_0 : i32, i32
  }
  func.func @transform_9(%arg0: i32) -> (i32, i32) {
    %c0_i32 = arith.constant 0 : i32
    %c0_i32_0 = arith.constant 0 : i32
    %c0_i32_1 = arith.constant 0 : i32
    return %c0_i32, %c0_i32_0 : i32, i32
  }
  func.func @transform_10(%arg0: i32) -> (i32, i32) {
    %c0_i32 = arith.constant 0 : i32
    %c0_i32_0 = arith.constant 0 : i32
    return %arg0, %c0_i32 : i32, i32
  }
}

</mosaic_0001>

<llo_original>
// kernel: mlp_forward.1
$region0: #{mlp_forward.1}
  #allocation0 [shape = 'u32[]', space=smem, size = 0x4, offset = 0x4, fixed_abs, tag = 'smem constant byte address 0x4 - core index']
  #allocation1 [shape = 'u32[144,128]{1,0:T(1,128)}', space=vmem, size = 0x12000, scoped, tag = 'internal scratch']
  %s0 = inlined_call_operand.vmem [shape: s32[8,8], index: 0, kind: input, shape index: {}]
  %s1 = inlined_call_operand.vmem [shape: bf16[128,128], index: 1, kind: input, shape index: {}]
  %s2 = inlined_call_operand.vmem [shape: bf16[128,128], index: 2, kind: input, shape index: {}]
  %s3 = inlined_call_operand.vmem [shape: f32[1,128], index: 3, kind: input, shape index: {}]
  %s4 = inlined_call_operand.vmem [shape: bf16[128,128], index: 4, kind: input, shape index: {}]
  %s5 = inlined_call_operand.vmem [shape: f32[1,128], index: 5, kind: input, shape index: {}]
  %s6 = inlined_call_operand.vmem [shape: bf16[128,128], index: 6, kind: input, shape index: {}]
  %s7 = inlined_call_operand.vmem [shape: f32[1,128], index: 7, kind: input, shape index: {}]
  %s8 = inlined_call_operand.vmem [shape: bf16[128,128], index: 8, kind: input, shape index: {}]
  %s9 = inlined_call_operand.vmem [shape: f32[1,128], index: 9, kind: input, shape index: {}]
  %s10 = inlined_call_operand.vmem [shape: f32[8,128], index: 10, kind: output, shape index: {}]
  %s11 = sld [smem:[#allocation0]]
  $region50: #{mlp_forward.1} parent=0
    _
  %s13 = ssub.s32 1, %s11
  %s14 = scalar_select 0, %s13, %s11
  // Predicated region
  $region2: #{mlp_forward.1} parent=0 // pred_check
    _
  $region3: #{mlp_forward.1} parent=0 // pred_check_branch
    %16 = sbr.rel (0) target = $region5
  $region4: #{mlp_forward.1} parent=0 // pred_region
    _
  $region5: #{mlp_forward.1} parent=0 // pred_fallthru
    _
  // Predicated region
  $region6: #{mlp_forward.1} parent=0 // pred_check
    _
  $region7: #{mlp_forward.1} parent=0 // pred_check_branch
    %18 = sbr.rel (0) target = $region9
  $region8: #{mlp_forward.1} parent=0 // pred_region
    _
  $region9: #{mlp_forward.1} parent=0 // pred_fallthru
    _
  // Predicated region
  $region10: #{mlp_forward.1} parent=0 // pred_check
    _
  $region11: #{mlp_forward.1} parent=0 // pred_check_branch
    %20 = sbr.rel (0) target = $region13
  $region12: #{mlp_forward.1} parent=0 // pred_region
    _
  $region13: #{mlp_forward.1} parent=0 // pred_fallthru
    _
  // Predicated region
  $region14: #{mlp_forward.1} parent=0 // pred_check
    _
  $region15: #{mlp_forward.1} parent=0 // pred_check_branch
    %22 = sbr.rel (0) target = $region17
  $region16: #{mlp_forward.1} parent=0 // pred_region
    _
  $region17: #{mlp_forward.1} parent=0 // pred_fallthru
    _
  // Predicated region
  $region18: #{mlp_forward.1} parent=0 // pred_check
    _
  $region19: #{mlp_forward.1} parent=0 // pred_check_branch
    %24 = sbr.rel (0) target = $region21
  $region20: #{mlp_forward.1} parent=0 // pred_region
    _
  $region21: #{mlp_forward.1} parent=0 // pred_fallthru
    _
  // Predicated region
  $region22: #{mlp_forward.1} parent=0 // pred_check
    _
  $region23: #{mlp_forward.1} parent=0 // pred_check_branch
    %26 = sbr.rel (0) target = $region25
  $region24: #{mlp_forward.1} parent=0 // pred_region
    _
  $region25: #{mlp_forward.1} parent=0 // pred_fallthru
    _
  // Predicated region
  $region26: #{mlp_forward.1} parent=0 // pred_check
    _
  $region27: #{mlp_forward.1} parent=0 // pred_check_branch
    %28 = sbr.rel (0) target = $region29
  $region28: #{mlp_forward.1} parent=0 // pred_region
    _
  $region29: #{mlp_forward.1} parent=0 // pred_fallthru
    _
  // Predicated region
  $region30: #{mlp_forward.1} parent=0 // pred_check
    _
  $region31: #{mlp_forward.1} parent=0 // pred_check_branch
    %30 = sbr.rel (0) target = $region33
  $region32: #{mlp_forward.1} parent=0 // pred_region
    _
  $region33: #{mlp_forward.1} parent=0 // pred_fallthru
    _
  // Predicated region
  $region34: #{mlp_forward.1} parent=0 // pred_check
    _
  $region35: #{mlp_forward.1} parent=0 // pred_check_branch
    %32 = sbr.rel (0) target = $region37
  $region36: #{mlp_forward.1} parent=0 // pred_region
    _
  $region37: #{mlp_forward.1} parent=0 // pred_fallthru
    _
  // Predicated region
  $region38: #{mlp_forward.1} parent=0 // pred_check
    _
  $region39: #{mlp_forward.1} parent=0 // pred_check_branch
    %34 = sbr.rel (0) target = $region41
  $region40: #{mlp_forward.1} parent=0 // pred_region
    _
  $region41: #{mlp_forward.1} parent=0 // pred_fallthru
    _
  %v36 = vld [vmem:[%s0] sm:$0xff]
  %v37 = vlaneseq
  %v38 = vand.u32 %v37, 127
  %39 = vset.pattern.permute.xlu0 0
  %40 = vperm.xlu0 %39, %v36
  %v41 = vpop.permute.xlu0 %40
  %vm42 = vcmp.eq.s32.totalorder %v38, %v41
  %v43 = vsel %vm42, 1, 0
  %v44 = vcvt.s32.f32 %v43
  %v45 = vadd.f32 %v44, 0.0
  %46 = vset.pattern.permute.xlu0 1
  %47 = vperm.xlu0 %46, %v36
  %v48 = vpop.permute.xlu0 %47
  %vm49 = vcmp.eq.s32.totalorder %v38, %v48
  %v50 = vsel %vm49, 1, 0
  %v51 = vcvt.s32.f32 %v50
  %v52 = vadd.f32 %v45, %v51
  %53 = vset.pattern.permute.xlu0 2
  %54 = vperm.xlu0 %53, %v36
  %v55 = vpop.permute.xlu0 %54
  %vm56 = vcmp.eq.s32.totalorder %v38, %v55
  %v57 = vsel %vm56, 1, 0
  %v58 = vcvt.s32.f32 %v57
  %v59 = vadd.f32 %v52, %v58
  %60 = vset.pattern.permute.xlu0 3
  %61 = vperm.xlu0 %60, %v36
  %v62 = vpop.permute.xlu0 %61
  %vm63 = vcmp.eq.s32.totalorder %v38, %v62
  %v64 = vsel %vm63, 1, 0
  %v65 = vcvt.s32.f32 %v64
  %v66 = vadd.f32 %v59, %v65
  %67 = vset.pattern.permute.xlu0 4
  %68 = vperm.xlu0 %67, %v36
  %v69 = vpop.permute.xlu0 %68
  %vm70 = vcmp.eq.s32.totalorder %v38, %v69
  %v71 = vsel %vm70, 1, 0
  %v72 = vcvt.s32.f32 %v71
  %v73 = vadd.f32 %v66, %v72
  %74 = vset.pattern.permute.xlu0 5
  %75 = vperm.xlu0 %74, %v36
  %v76 = vpop.permute.xlu0 %75
  %vm77 = vcmp.eq.s32.totalorder %v38, %v76
  %v78 = vsel %vm77, 1, 0
  %v79 = vcvt.s32.f32 %v78
  %v80 = vadd.f32 %v73, %v79
  %81 = vset.pattern.permute.xlu0 6
  %82 = vperm.xlu0 %81, %v36
  %v83 = vpop.permute.xlu0 %82
  %vm84 = vcmp.eq.s32.totalorder %v38, %v83
  %v85 = vsel %vm84, 1, 0
  %v86 = vcvt.s32.f32 %v85
  %v87 = vadd.f32 %v80, %v86
  %88 = vset.pattern.permute.xlu0 7
  %89 = vperm.xlu0 %88, %v36
  %v90 = vpop.permute.xlu0 %89
  %vm91 = vcmp.eq.s32.totalorder %v38, %v90
  %v92 = vsel %vm91, 1, 0
  %v93 = vcvt.s32.f32 %v92
  %v94 = vadd.f32 %v87, %v93
  %v95 = vmul.f32 %v94, 0.125
  %v96 = vpack.c.bf16 %v95, %v95
  %v97 = vld [vmem:[%s1] sm:$0xf]
  %v98 = vld [vmem:[%s1 + $0x4] sm:$0xf]
  %v99 = vld [vmem:[%s1 + $0x8] sm:$0xf]
  %v100 = vld [vmem:[%s1 + $0xc] sm:$0xf]
  %v101 = vld [vmem:[%s1 + $0x10] sm:$0xf]
  %v102 = vld [vmem:[%s1 + $0x14] sm:$0xf]
  %v103 = vld [vmem:[%s1 + $0x18] sm:$0xf]
  %v104 = vld [vmem:[%s1 + $0x1c] sm:$0xf]
  %v105 = vld [vmem:[%s1 + $0x20] sm:$0xf]
  %v106 = vld [vmem:[%s1 + $0x24] sm:$0xf]
  %v107 = vld [vmem:[%s1 + $0x28] sm:$0xf]
  %v108 = vld [vmem:[%s1 + $0x2c] sm:$0xf]
  %v109 = vld [vmem:[%s1 + $0x30] sm:$0xf]
  %v110 = vld [vmem:[%s1 + $0x34] sm:$0xf]
  %v111 = vld [vmem:[%s1 + $0x38] sm:$0xf]
  %v112 = vld [vmem:[%s1 + $0x3c] sm:$0xf]
  %v129 = vunpack.c.l.b16 %v97
  %v130 = vunpack.c.l.b16 %v98
  %v131 = vunpack.c.l.b16 %v99
  %v132 = vunpack.c.l.b16 %v100
  %v133 = vunpack.c.l.b16 %v101
  %v134 = vunpack.c.l.b16 %v102
  %v135 = vunpack.c.l.b16 %v103
  %v136 = vunpack.c.l.b16 %v104
  %v137 = vunpack.c.l.b16 %v105
  %v138 = vunpack.c.l.b16 %v106
  %v139 = vunpack.c.l.b16 %v107
  %v140 = vunpack.c.l.b16 %v108
  %v141 = vunpack.c.l.b16 %v109
  %v142 = vunpack.c.l.b16 %v110
  %v143 = vunpack.c.l.b16 %v111
  %v144 = vunpack.c.l.b16 %v112
  %v145 = vpack.c.b16 %v130, %v129
  %v146 = vpack.c.b16 %v132, %v131
  %v147 = vpack.c.b16 %v134, %v133
  %v148 = vpack.c.b16 %v136, %v135
  %v149 = vpack.c.b16 %v138, %v137
  %v150 = vpack.c.b16 %v140, %v139
  %v151 = vpack.c.b16 %v142, %v141
  %v152 = vpack.c.b16 %v144, %v143
  %161 = vmatprep.subr.bf16.mxu0 0
  %162 = vmatpush1.bf16.msra.mxu0 %v152
  %163 = vmatprep.subr.bf16.mxu0 0
  %164 = vmatpush1.bf16.msra.mxu0 %v151
  %165 = vmatprep.subr.bf16.mxu0 0
  %166 = vmatpush1.bf16.msra.mxu0 %v150
  %167 = vmatprep.subr.bf16.mxu0 0
  %168 = vmatpush1.bf16.msra.mxu0 %v149
  %169 = vmatprep.subr.bf16.mxu0 0
  %170 = vmatpush1.bf16.msra.mxu0 %v148
  %171 = vmatprep.subr.bf16.mxu0 0
  %172 = vmatpush1.bf16.msra.mxu0 %v147
  %173 = vmatprep.subr.bf16.mxu0 0
  %174 = vmatpush1.bf16.msra.mxu0 %v146
  %175 = vmatprep.subr.bf16.mxu0 0
  %176 = vmatpush1.bf16.msra.mxu0 %v145
  %177 = vmatprep.subr.bf16.mxu0 0
  %178 = vmatpush2.bf16.msra.mxu0 0
  %179 = vmatprep.subr.bf16.mxu0 0
  %180 = vmatpush2.bf16.msra.mxu0 0
  %181 = vmatprep.subr.bf16.mxu0 0
  %182 = vmatpush2.bf16.msra.mxu0 0
  %183 = vmatprep.subr.bf16.mxu0 0
  %184 = vmatpush2.bf16.msra.mxu0 0
  %185 = vmatprep.subr.bf16.mxu0 0
  %186 = vmatpush2.bf16.msra.mxu0 0
  %187 = vmatprep.subr.bf16.mxu0 0
  %188 = vmatpush2.bf16.msra.mxu0 0
  %189 = vmatprep.subr.bf16.mxu0 0
  %190 = vmatpush2.bf16.msra.mxu0 0
  %191 = vmatprep.subr.bf16.mxu0 0
  %192 = vmatpush2.bf16.msra.mxu0 0
  %193 = vmatprep.mubr.bf16.mxu0 0
  %194 = vmatmul.mubr.bf16.gmra.mxu0 %v96
  %v195 = vpop.f32.mrf.mxu0
  %v196 = vadd.f32 0.0, %v195
  %v197 = vpop.f32.mrf.mxu0
  %v198 = vpop.f32.mrf.mxu0
  %v199 = vpop.f32.mrf.mxu0
  %200 = vdwg.mxu0
  %v201 = vpack.c.bf16 %v196, %v196
  %v202 = vld [vmem:[%s2] sm:$0xf]
  %v203 = vld [vmem:[%s2 + $0x4] sm:$0xf]
  %v204 = vld [vmem:[%s2 + $0x8] sm:$0xf]
  %v205 = vld [vmem:[%s2 + $0xc] sm:$0xf]
  %v206 = vld [vmem:[%s2 + $0x10] sm:$0xf]
  %v207 = vld [vmem:[%s2 + $0x14] sm:$0xf]
  %v208 = vld [vmem:[%s2 + $0x18] sm:$0xf]
  %v209 = vld [vmem:[%s2 + $0x1c] sm:$0xf]
  %v210 = vld [vmem:[%s2 + $0x20] sm:$0xf]
  %v211 = vld [vmem:[%s2 + $0x24] sm:$0xf]
  %v212 = vld [vmem:[%s2 + $0x28] sm:$0xf]
  %v213 = vld [vmem:[%s2 + $0x2c] sm:$0xf]
  %v214 = vld [vmem:[%s2 + $0x30] sm:$0xf]
  %v215 = vld [vmem:[%s2 + $0x34] sm:$0xf]
  %v216 = vld [vmem:[%s2 + $0x38] sm:$0xf]
  %v217 = vld [vmem:[%s2 + $0x3c] sm:$0xf]
  %v218 = vld [vmem:[%s3] sm:$0x1]
  %v220 = vlaneseq
  %v221 = vshrl.u32 %v220, 7
  %v222 = vsub.s32 0, %v221
  %v223 = vrot.slane %v218, %v222
  %v241 = vunpack.c.l.b16 %v202
  %v242 = vunpack.c.l.b16 %v203
  %v243 = vunpack.c.l.b16 %v204
  %v244 = vunpack.c.l.b16 %v205
  %v245 = vunpack.c.l.b16 %v206
  %v246 = vunpack.c.l.b16 %v207
  %v247 = vunpack.c.l.b16 %v208
  %v248 = vunpack.c.l.b16 %v209
  %v249 = vunpack.c.l.b16 %v210
  %v250 = vunpack.c.l.b16 %v211
  %v251 = vunpack.c.l.b16 %v212
  %v252 = vunpack.c.l.b16 %v213
  %v253 = vunpack.c.l.b16 %v214
  %v254 = vunpack.c.l.b16 %v215
  %v255 = vunpack.c.l.b16 %v216
  %v256 = vunpack.c.l.b16 %v217
  %v257 = vpack.c.b16 %v242, %v241
  %v258 = vpack.c.b16 %v244, %v243
  %v259 = vpack.c.b16 %v246, %v245
  %v260 = vpack.c.b16 %v248, %v247
  %v261 = vpack.c.b16 %v250, %v249
  %v262 = vpack.c.b16 %v252, %v251
  %v263 = vpack.c.b16 %v254, %v253
  %v264 = vpack.c.b16 %v256, %v255
  %273 = vmatprep.subr.bf16.mxu0 0
  %274 = vmatpush1.bf16.msra.mxu0 %v264
  %275 = vmatprep.subr.bf16.mxu0 0
  %276 = vmatpush1.bf16.msra.mxu0 %v263
  %277 = vmatprep.subr.bf16.mxu0 0
  %278 = vmatpush1.bf16.msra.mxu0 %v262
  %279 = vmatprep.subr.bf16.mxu0 0
  %280 = vmatpush1.bf16.msra.mxu0 %v261
  %281 = vmatprep.subr.bf16.mxu0 0
  %282 = vmatpush1.bf16.msra.mxu0 %v260
  %283 = vmatprep.subr.bf16.mxu0 0
  %284 = vmatpush1.bf16.msra.mxu0 %v259
  %285 = vmatprep.subr.bf16.mxu0 0
  %286 = vmatpush1.bf16.msra.mxu0 %v258
  %287 = vmatprep.subr.bf16.mxu0 0
  %288 = vmatpush1.bf16.msra.mxu0 %v257
  %289 = vmatprep.subr.bf16.mxu0 0
  %290 = vmatpush2.bf16.msra.mxu0 0
  %291 = vmatprep.subr.bf16.mxu0 0
  %292 = vmatpush2.bf16.msra.mxu0 0
  %293 = vmatprep.subr.bf16.mxu0 0
  %294 = vmatpush2.bf16.msra.mxu0 0
  %295 = vmatprep.subr.bf16.mxu0 0
  %296 = vmatpush2.bf16.msra.mxu0 0
  %297 = vmatprep.subr.bf16.mxu0 0
  %298 = vmatpush2.bf16.msra.mxu0 0
  %299 = vmatprep.subr.bf16.mxu0 0
  %300 = vmatpush2.bf16.msra.mxu0 0
  %301 = vmatprep.subr.bf16.mxu0 0
  %302 = vmatpush2.bf16.msra.mxu0 0
  %303 = vmatprep.subr.bf16.mxu0 0
  %304 = vmatpush2.bf16.msra.mxu0 0
  %305 = vmatprep.mubr.bf16.mxu0 0
  %306 = vmatmul.mubr.bf16.gmra.mxu0 %v201
  %v307 = vpop.f32.mrf.mxu0
  %v308 = vadd.f32 %v223, %v307
  %v309 = vpop.f32.mrf.mxu0
  %v310 = vpop.f32.mrf.mxu0
  %v311 = vpop.f32.mrf.mxu0
  %312 = vdwg.mxu0
  %v313 = vmax.f32 %v308, 0.0
  %v314 = vpack.c.bf16 %v313, %v313
  %v315 = vld [vmem:[%s4] sm:$0xf]
  %v316 = vld [vmem:[%s4 + $0x4] sm:$0xf]
  %v317 = vld [vmem:[%s4 + $0x8] sm:$0xf]
  %v318 = vld [vmem:[%s4 + $0xc] sm:$0xf]
  %v319 = vld [vmem:[%s4 + $0x10] sm:$0xf]
  %v320 = vld [vmem:[%s4 + $0x14] sm:$0xf]
  %v321 = vld [vmem:[%s4 + $0x18] sm:$0xf]
  %v322 = vld [vmem:[%s4 + $0x1c] sm:$0xf]
  %v323 = vld [vmem:[%s4 + $0x20] sm:$0xf]
  %v324 = vld [vmem:[%s4 + $0x24] sm:$0xf]
  %v325 = vld [vmem:[%s4 + $0x28] sm:$0xf]
  %v326 = vld [vmem:[%s4 + $0x2c] sm:$0xf]
  %v327 = vld [vmem:[%s4 + $0x30] sm:$0xf]
  %v328 = vld [vmem:[%s4 + $0x34] sm:$0xf]
  %v329 = vld [vmem:[%s4 + $0x38] sm:$0xf]
  %v330 = vld [vmem:[%s4 + $0x3c] sm:$0xf]
  %v331 = vld [vmem:[%s5] sm:$0x1]
  %v333 = vlaneseq
  %v334 = vshrl.u32 %v333, 7
  %v335 = vsub.s32 0, %v334
  %v336 = vrot.slane %v331, %v335
  %v354 = vunpack.c.l.b16 %v315
  %v355 = vunpack.c.l.b16 %v316
  %v356 = vunpack.c.l.b16 %v317
  %v357 = vunpack.c.l.b16 %v318
  %v358 = vunpack.c.l.b16 %v319
  %v359 = vunpack.c.l.b16 %v320
  %v360 = vunpack.c.l.b16 %v321
  %v361 = vunpack.c.l.b16 %v322
  %v362 = vunpack.c.l.b16 %v323
  %v363 = vunpack.c.l.b16 %v324
  %v364 = vunpack.c.l.b16 %v325
  %v365 = vunpack.c.l.b16 %v326
  %v366 = vunpack.c.l.b16 %v327
  %v367 = vunpack.c.l.b16 %v328
  %v368 = vunpack.c.l.b16 %v329
  %v369 = vunpack.c.l.b16 %v330
  %v370 = vpack.c.b16 %v355, %v354
  %v371 = vpack.c.b16 %v357, %v356
  %v372 = vpack.c.b16 %v359, %v358
  %v373 = vpack.c.b16 %v361, %v360
  %v374 = vpack.c.b16 %v363, %v362
  %v375 = vpack.c.b16 %v365, %v364
  %v376 = vpack.c.b16 %v367, %v366
  %v377 = vpack.c.b16 %v369, %v368
  %386 = vmatprep.subr.bf16.mxu0 0
  %387 = vmatpush1.bf16.msra.mxu0 %v377
  %388 = vmatprep.subr.bf16.mxu0 0
  %389 = vmatpush1.bf16.msra.mxu0 %v376
  %390 = vmatprep.subr.bf16.mxu0 0
  %391 = vmatpush1.bf16.msra.mxu0 %v375
  %392 = vmatprep.subr.bf16.mxu0 0
  %393 = vmatpush1.bf16.msra.mxu0 %v374
  %394 = vmatprep.subr.bf16.mxu0 0
  %395 = vmatpush1.bf16.msra.mxu0 %v373
  %396 = vmatprep.subr.bf16.mxu0 0
  %397 = vmatpush1.bf16.msra.mxu0 %v372
  %398 = vmatprep.subr.bf16.mxu0 0
  %399 = vmatpush1.bf16.msra.mxu0 %v371
  %400 = vmatprep.subr.bf16.mxu0 0
  %401 = vmatpush1.bf16.msra.mxu0 %v370
  %402 = vmatprep.subr.bf16.mxu0 0
  %403 = vmatpush2.bf16.msra.mxu0 0
  %404 = vmatprep.subr.bf16.mxu0 0
  %405 = vmatpush2.bf16.msra.mxu0 0
  %406 = vmatprep.subr.bf16.mxu0 0
  %407 = vmatpush2.bf16.msra.mxu0 0
  %408 = vmatprep.subr.bf16.mxu0 0
  %409 = vmatpush2.bf16.msra.mxu0 0
  %410 = vmatprep.subr.bf16.mxu0 0
  %411 = vmatpush2.bf16.msra.mxu0 0
  %412 = vmatprep.subr.bf16.mxu0 0
  %413 = vmatpush2.bf16.msra.mxu0 0
  %414 = vmatprep.subr.bf16.mxu0 0
  %415 = vmatpush2.bf16.msra.mxu0 0
  %416 = vmatprep.subr.bf16.mxu0 0
  %417 = vmatpush2.bf16.msra.mxu0 0
  %418 = vmatprep.mubr.bf16.mxu0 0
  %419 = vmatmul.mubr.bf16.gmra.mxu0 %v314
  %v420 = vpop.f32.mrf.mxu0
  %v421 = vadd.f32 %v336, %v420
  %v422 = vpop.f32.mrf.mxu0
  %v423 = vpop.f32.mrf.mxu0
  %v424 = vpop.f32.mrf.mxu0
  %425 = vdwg.mxu0
  %v426 = vmax.f32 %v421, 0.0
  %v427 = vpack.c.bf16 %v426, %v426
  %v428 = vld [vmem:[%s6] sm:$0xf]
  %v429 = vld [vmem:[%s6 + $0x4] sm:$0xf]
  %v430 = vld [vmem:[%s6 + $0x8] sm:$0xf]
  %v431 = vld [vmem:[%s6 + $0xc] sm:$0xf]
  %v432 = vld [vmem:[%s6 + $0x10] sm:$0xf]
  %v433 = vld [vmem:[%s6 + $0x14] sm:$0xf]
  %v434 = vld [vmem:[%s6 + $0x18] sm:$0xf]
  %v435 = vld [vmem:[%s6 + $0x1c] sm:$0xf]
  %v436 = vld [vmem:[%s6 + $0x20] sm:$0xf]
  %v437 = vld [vmem:[%s6 + $0x24] sm:$0xf]
  %v438 = vld [vmem:[%s6 + $0x28] sm:$0xf]
  %v439 = vld [vmem:[%s6 + $0x2c] sm:$0xf]
  %v440 = vld [vmem:[%s6 + $0x30] sm:$0xf]
  %v441 = vld [vmem:[%s6 + $0x34] sm:$0xf]
  %v442 = vld [vmem:[%s6 + $0x38] sm:$0xf]
  %v443 = vld [vmem:[%s6 + $0x3c] sm:$0xf]
  %v444 = vld [vmem:[%s7] sm:$0x1]
  %v446 = vlaneseq
  %v447 = vshrl.u32 %v446, 7
  %v448 = vsub.s32 0, %v447
  %v449 = vrot.slane %v444, %v448
  %v467 = vunpack.c.l.b16 %v428
  %v468 = vunpack.c.l.b16 %v429
  %v469 = vunpack.c.l.b16 %v430
  %v470 = vunpack.c.l.b16 %v431
  %v471 = vunpack.c.l.b16 %v432
  %v472 = vunpack.c.l.b16 %v433
  %v473 = vunpack.c.l.b16 %v434
  %v474 = vunpack.c.l.b16 %v435
  %v475 = vunpack.c.l.b16 %v436
  %v476 = vunpack.c.l.b16 %v437
  %v477 = vunpack.c.l.b16 %v438
  %v478 = vunpack.c.l.b16 %v439
  %v479 = vunpack.c.l.b16 %v440
  %v480 = vunpack.c.l.b16 %v441
  %v481 = vunpack.c.l.b16 %v442
  %v482 = vunpack.c.l.b16 %v443
  %v483 = vpack.c.b16 %v468, %v467
  %v484 = vpack.c.b16 %v470, %v469
  %v485 = vpack.c.b16 %v472, %v471
  %v486 = vpack.c.b16 %v474, %v473
  %v487 = vpack.c.b16 %v476, %v475
  %v488 = vpack.c.b16 %v478, %v477
  %v489 = vpack.c.b16 %v480, %v479
  %v490 = vpack.c.b16 %v482, %v481
  %499 = vmatprep.subr.bf16.mxu0 0
  %500 = vmatpush1.bf16.msra.mxu0 %v490
  %501 = vmatprep.subr.bf16.mxu0 0
  %502 = vmatpush1.bf16.msra.mxu0 %v489
  %503 = vmatprep.subr.bf16.mxu0 0
  %504 = vmatpush1.bf16.msra.mxu0 %v488
  %505 = vmatprep.subr.bf16.mxu0 0
  %506 = vmatpush1.bf16.msra.mxu0 %v487
  %507 = vmatprep.subr.bf16.mxu0 0
  %508 = vmatpush1.bf16.msra.mxu0 %v486
  %509 = vmatprep.subr.bf16.mxu0 0
  %510 = vmatpush1.bf16.msra.mxu0 %v485
  %511 = vmatprep.subr.bf16.mxu0 0
  %512 = vmatpush1.bf16.msra.mxu0 %v484
  %513 = vmatprep.subr.bf16.mxu0 0
  %514 = vmatpush1.bf16.msra.mxu0 %v483
  %515 = vmatprep.subr.bf16.mxu0 0
  %516 = vmatpush2.bf16.msra.mxu0 0
  %517 = vmatprep.subr.bf16.mxu0 0
  %518 = vmatpush2.bf16.msra.mxu0 0
  %519 = vmatprep.subr.bf16.mxu0 0
  %520 = vmatpush2.bf16.msra.mxu0 0
  %521 = vmatprep.subr.bf16.mxu0 0
  %522 = vmatpush2.bf16.msra.mxu0 0
  %523 = vmatprep.subr.bf16.mxu0 0
  %524 = vmatpush2.bf16.msra.mxu0 0
  %525 = vmatprep.subr.bf16.mxu0 0
  %526 = vmatpush2.bf16.msra.mxu0 0
  %527 = vmatprep.subr.bf16.mxu0 0
  %528 = vmatpush2.bf16.msra.mxu0 0
  %529 = vmatprep.subr.bf16.mxu0 0
  %530 = vmatpush2.bf16.msra.mxu0 0
  %531 = vmatprep.mubr.bf16.mxu0 0
  %532 = vmatmul.mubr.bf16.gmra.mxu0 %v427
  %v533 = vpop.f32.mrf.mxu0
  %v534 = vadd.f32 %v449, %v533
  %v535 = vpop.f32.mrf.mxu0
  %v536 = vpop.f32.mrf.mxu0
  %v537 = vpop.f32.mrf.mxu0
  %538 = vdwg.mxu0
  %v539 = vmax.f32 %v534, 0.0
  %v540 = vpack.c.bf16 %v539, %v539
  %v541 = vld [vmem:[%s8] sm:$0xf]
  %v542 = vld [vmem:[%s8 + $0x4] sm:$0xf]
  %v543 = vld [vmem:[%s8 + $0x8] sm:$0xf]
  %v544 = vld [vmem:[%s8 + $0xc] sm:$0xf]
  %v545 = vld [vmem:[%s8 + $0x10] sm:$0xf]
  %v546 = vld [vmem:[%s8 + $0x14] sm:$0xf]
  %v547 = vld [vmem:[%s8 + $0x18] sm:$0xf]
  %v548 = vld [vmem:[%s8 + $0x1c] sm:$0xf]
  %v549 = vld [vmem:[%s8 + $0x20] sm:$0xf]
  %v550 = vld [vmem:[%s8 + $0x24] sm:$0xf]
  %v551 = vld [vmem:[%s8 + $0x28] sm:$0xf]
  %v552 = vld [vmem:[%s8 + $0x2c] sm:$0xf]
  %v553 = vld [vmem:[%s8 + $0x30] sm:$0xf]
  %v554 = vld [vmem:[%s8 + $0x34] sm:$0xf]
  %v555 = vld [vmem:[%s8 + $0x38] sm:$0xf]
  %v556 = vld [vmem:[%s8 + $0x3c] sm:$0xf]
  %v557 = vld [vmem:[%s9] sm:$0x1]
  %v559 = vlaneseq
  %v560 = vshrl.u32 %v559, 7
  %v561 = vsub.s32 0, %v560
  %v562 = vrot.slane %v557, %v561
  %v580 = vunpack.c.l.b16 %v541
  %v581 = vunpack.c.l.b16 %v542
  %v582 = vunpack.c.l.b16 %v543
  %v583 = vunpack.c.l.b16 %v544
  %v584 = vunpack.c.l.b16 %v545
  %v585 = vunpack.c.l.b16 %v546
  %v586 = vunpack.c.l.b16 %v547
  %v587 = vunpack.c.l.b16 %v548
  %v588 = vunpack.c.l.b16 %v549
  %v589 = vunpack.c.l.b16 %v550
  %v590 = vunpack.c.l.b16 %v551
  %v591 = vunpack.c.l.b16 %v552
  %v592 = vunpack.c.l.b16 %v553
  %v593 = vunpack.c.l.b16 %v554
  %v594 = vunpack.c.l.b16 %v555
  %v595 = vunpack.c.l.b16 %v556
  %v596 = vpack.c.b16 %v581, %v580
  %v597 = vpack.c.b16 %v583, %v582
  %v598 = vpack.c.b16 %v585, %v584
  %v599 = vpack.c.b16 %v587, %v586
  %v600 = vpack.c.b16 %v589, %v588
  %v601 = vpack.c.b16 %v591, %v590
  %v602 = vpack.c.b16 %v593, %v592
  %v603 = vpack.c.b16 %v595, %v594
  %612 = vmatprep.subr.bf16.mxu0 0
  %613 = vmatpush1.bf16.msra.mxu0 %v603
  %614 = vmatprep.subr.bf16.mxu0 0
  %615 = vmatpush1.bf16.msra.mxu0 %v602
  %616 = vmatprep.subr.bf16.mxu0 0
  %617 = vmatpush1.bf16.msra.mxu0 %v601
  %618 = vmatprep.subr.bf16.mxu0 0
  %619 = vmatpush1.bf16.msra.mxu0 %v600
  %620 = vmatprep.subr.bf16.mxu0 0
  %621 = vmatpush1.bf16.msra.mxu0 %v599
  %622 = vmatprep.subr.bf16.mxu0 0
  %623 = vmatpush1.bf16.msra.mxu0 %v598
  %624 = vmatprep.subr.bf16.mxu0 0
  %625 = vmatpush1.bf16.msra.mxu0 %v597
  %626 = vmatprep.subr.bf16.mxu0 0
  %627 = vmatpush1.bf16.msra.mxu0 %v596
  %628 = vmatprep.subr.bf16.mxu0 0
  %629 = vmatpush2.bf16.msra.mxu0 0
  %630 = vmatprep.subr.bf16.mxu0 0
  %631 = vmatpush2.bf16.msra.mxu0 0
  %632 = vmatprep.subr.bf16.mxu0 0
  %633 = vmatpush2.bf16.msra.mxu0 0
  %634 = vmatprep.subr.bf16.mxu0 0
  %635 = vmatpush2.bf16.msra.mxu0 0
  %636 = vmatprep.subr.bf16.mxu0 0
  %637 = vmatpush2.bf16.msra.mxu0 0
  %638 = vmatprep.subr.bf16.mxu0 0
  %639 = vmatpush2.bf16.msra.mxu0 0
  %640 = vmatprep.subr.bf16.mxu0 0
  %641 = vmatpush2.bf16.msra.mxu0 0
  %642 = vmatprep.subr.bf16.mxu0 0
  %643 = vmatpush2.bf16.msra.mxu0 0
  %644 = vmatprep.mubr.bf16.mxu0 0
  %645 = vmatmul.mubr.bf16.gmra.mxu0 %v540
  %v646 = vpop.f32.mrf.mxu0
  %v647 = vadd.f32 %v562, %v646
  %v648 = vpop.f32.mrf.mxu0
  %v649 = vpop.f32.mrf.mxu0
  %v650 = vpop.f32.mrf.mxu0
  %651 = vdwg.mxu0
  %652 = vst [vmem:[%s10] sm:$0xff] %v647
  // Predicated region
  $region42: #{mlp_forward.1} parent=0 // pred_check
    _
  $region43: #{mlp_forward.1} parent=0 // pred_check_branch
    %654 = sbr.rel (0) target = $region45
  $region44: #{mlp_forward.1} parent=0 // pred_region
    _
  $region45: #{mlp_forward.1} parent=0 // pred_fallthru
    _
  // Predicated region
  $region46: #{mlp_forward.1} parent=0 // pred_check
    _
  $region47: #{mlp_forward.1} parent=0 // pred_check_branch
    %656 = sbr.rel (0) target = $region49
  $region48: #{mlp_forward.1} parent=0 // pred_region
    _
  $region49: #{mlp_forward.1} parent=0 // pred_fallthru
    _

</llo_original>
